<compile_context>
chip_gen: v7x
topology: tpu7x:2x2x1
jax: 0.10.0
libtpu: 0.0.40
codegen_flags: <defaults>
</compile_context>

<pallas_src>
import functools

import numpy as np
import jax
import jax.numpy as jnp
from jax.experimental import pallas as pl
from jax.experimental.pallas import tpu as pltpu


# ----------------------------------------------------------------------------
# Kernel 1: fused theta+phi matmul -> ReLU -> psi (VPU multiply-reduce) logits.
# One batch element per grid step; everything is half-resolution.
# ----------------------------------------------------------------------------
def attn_logits_kernel(xg_ref, wf_ref, bphi_ref, wpsi_ref, bpsi_ref, o_ref):
    xg = xg_ref[0]                                        # (Nh, Cin*8 + Cg)
    # theta (k=2,s=2, as patch matmul) and phi (1x1x1) fused into ONE matmul.
    h = jnp.maximum(
        jnp.dot(xg, wf_ref[...], preferred_element_type=jnp.float32)
        + bphi_ref[...],
        0.0)                                              # (Nh, inter)
    # psi: inter -> 1 conv as a lane-wise multiply-reduce; bias from SMEM.
    logits = (jnp.sum(h * wpsi_ref[...], axis=-1, keepdims=True)
              + bpsi_ref[0])                              # (Nh, 1)
    o_ref[0] = logits.astype(o_ref.dtype)


# ----------------------------------------------------------------------------
# Kernel 2: softmax over all half-res positions (lane-dense 2-D layout) and the
# separable W- and H-axis trilinear interpolation.  One batch element per step.
#   input  logits  (Dh*Hh, Wh)   [free wrapper reshape of kernel-1 output]
#   output up      (Dh*H,  W )   = Mh @ softmax(logits) @ Mw^T   per depth slice
# ----------------------------------------------------------------------------
def softmax_upsample_hw_kernel(l_ref, mwt_ref, mh_ref, o_ref, *, Dh, Hh, H):
    l = l_ref[0]                                          # (Dh*Hh, Wh)
    m = jnp.max(l)
    e = jnp.exp(l - m)
    r = pl.reciprocal(jnp.sum(e, keepdims=True), approx=True)   # (1, 1) on EUP
    attn = e * r                                          # softmax over volume
    # W-axis interpolation (all half-res rows at once)
    aw = jnp.dot(attn, mwt_ref[...], preferred_element_type=jnp.float32)  # (Dh*Hh, W)
    mh = mh_ref[...]                                      # (H, Hh)
    # H-axis interpolation, one half-res depth slice at a time (static unroll)
    for dd in range(Dh):
        o_ref[0, dd * H:(dd + 1) * H, :] = jnp.dot(
            mh, aw[dd * Hh:(dd + 1) * Hh, :],
            preferred_element_type=jnp.float32)


# ----------------------------------------------------------------------------
# Kernel 3: depth-axis interpolation for this depth tile + gating multiply,
# streamed over (batch, depth-tile).  x is consumed in its native NCDHW layout
# viewed as (B, C, D, H*W), so the output store is lane-dense.
# ----------------------------------------------------------------------------
def depth_upsample_gate_kernel(up_ref, md_ref, x_ref, y_ref):
    # (d_tile, Dh) @ (Dh, H*W) -> attention for this tile's depth slices
    attn_tile = jnp.dot(md_ref[...], up_ref[0],
                        preferred_element_type=jnp.float32)      # (d_tile, H*W)
    # gate x, broadcasting the attention map over the channel dimension
    y_ref[0] = (x_ref[0] * attn_tile[None, :, :]).astype(y_ref.dtype)


# ----------------------------------------------------------------------------
# Plain-JAX glue: layout transforms + parameter packing + 1-D interp matrices
# ----------------------------------------------------------------------------
def make_patches(x):
    """(B, C, D, H, W) -> (B, (D/2)(H/2)(W/2), C*8) patches for k=2,s=2 conv."""
    B, C, D, H, W = x.shape
    Dh, Hh, Wh = D // 2, H // 2, W // 2
    xr = x.reshape(B, C, Dh, 2, Hh, 2, Wh, 2)
    xr = xr.transpose(0, 2, 4, 6, 1, 3, 5, 7)   # (B, Dh, Hh, Wh, C, 2, 2, 2)
    return xr.reshape(B, Dh * Hh * Wh, C * 8)


def flatten_cl(t):
    """(B, C, D, H, W) -> (B, D*H*W, C) channels-last flat spatial."""
    B, C, D, H, W = t.shape
    return t.transpose(0, 2, 3, 4, 1).reshape(B, D * H * W, C)


def interp_matrix_1d(n_in, n_out):
    """PyTorch-style linear interp (align_corners=False) as (n_out, n_in)."""
    i = np.arange(n_out, dtype=np.float64)
    src = (i + 0.5) * (n_in / n_out) - 0.5
    src = np.clip(src, 0.0, None)
    i0 = np.floor(src).astype(np.int64)
    i0 = np.minimum(i0, n_in - 1)
    i1 = np.minimum(i0 + 1, n_in - 1)
    frac = src - i0
    M = np.zeros((n_out, n_in), dtype=np.float32)
    M[np.arange(n_out), i0] += (1.0 - frac).astype(np.float32)
    M[np.arange(n_out), i1] += frac.astype(np.float32)
    return M


def trilinear_matrix(dhw_in, dhw_out):
    """Dense kron form -- used only by the pure-JAX reference."""
    Md = interp_matrix_1d(dhw_in[0], dhw_out[0])
    Mh = interp_matrix_1d(dhw_in[1], dhw_out[1])
    Mw = interp_matrix_1d(dhw_in[2], dhw_out[2])
    return np.kron(Md, np.kron(Mh, Mw))


def attention_gate_pallas(x, g, params, d_tile=None):
    B, C_in, D, H, W = x.shape
    _, C_g, Dh, Hh, Wh = g.shape
    assert (Dh, Hh, Wh) == (D // 2, H // 2, W // 2)
    inter = params["w_theta"].shape[1]
    Nh = Dh * Hh * Wh
    Cf = C_in * 8 + C_g

    vmem_limit = 32 * 1024 * 1024   # safe on v5e/v6e/v7x; per-tile use is small

    # ---- fused [patches | gating] features + stacked weights (half-res data)
    xg = jnp.concatenate([make_patches(x), flatten_cl(g)], axis=-1)     # (B,Nh,Cf)
    wf = jnp.concatenate([params["w_theta"], params["w_phi"]], axis=0)  # (Cf,inter)
    b_phi = params["b_phi"].reshape(1, inter).astype(jnp.float32)
    w_psi = params["w_psi"].reshape(1, inter).astype(jnp.float32)       # row form
    b_psi = params["b_psi"].reshape(1).astype(jnp.float32)              # SMEM scalar

    # ---------------- kernel 1: half-res logits ----------------
    logits = pl.pallas_call(
        attn_logits_kernel,
        out_shape=jax.ShapeDtypeStruct((B, Nh, 1), jnp.float32),
        grid_spec=pltpu.PrefetchScalarGridSpec(
            num_scalar_prefetch=0,
            grid=(B,),
            in_specs=[
                pl.BlockSpec((1, Nh, Cf), lambda b: (b, 0, 0)),
                pl.BlockSpec((Cf, inter), lambda b: (0, 0)),
                pl.BlockSpec((1, inter), lambda b: (0, 0)),
                pl.BlockSpec((1, inter), lambda b: (0, 0)),
                pl.BlockSpec(memory_space=pltpu.MemorySpace.SMEM),
            ],
            out_specs=pl.BlockSpec((1, Nh, 1), lambda b: (b, 0, 0)),
        ),
        compiler_params=pltpu.CompilerParams(
            dimension_semantics=("parallel",),
            vmem_limit_bytes=vmem_limit),
    )(xg, wf, b_phi, w_psi, b_psi)

    # Free row-major reshape: (B, Nh, 1) -> (B, Dh*Hh, Wh) (lane dim = Wh).
    logits_hw = logits.reshape(B, Dh * Hh, Wh)

    # 1-D interpolation factors (separable trilinear, align_corners=False).
    Md = jnp.asarray(interp_matrix_1d(Dh, D))        # (D, Dh)
    Mh = jnp.asarray(interp_matrix_1d(Hh, H))        # (H, Hh)
    MwT = jnp.asarray(interp_matrix_1d(Wh, W).T)     # (Wh, W)

    # ---------------- kernel 2: softmax + H/W upsample ----------------
    up_hw = pl.pallas_call(
        functools.partial(softmax_upsample_hw_kernel, Dh=Dh, Hh=Hh, H=H),
        out_shape=jax.ShapeDtypeStruct((B, Dh * H, W), jnp.float32),
        grid_spec=pltpu.PrefetchScalarGridSpec(
            num_scalar_prefetch=0,
            grid=(B,),
            in_specs=[
                pl.BlockSpec((1, Dh * Hh, Wh), lambda b: (b, 0, 0)),
                pl.BlockSpec((Wh, W), lambda b: (0, 0)),
                pl.BlockSpec((H, Hh), lambda b: (0, 0)),
            ],
            out_specs=pl.BlockSpec((1, Dh * H, W), lambda b: (b, 0, 0)),
        ),
        compiler_params=pltpu.CompilerParams(
            dimension_semantics=("parallel",),
            vmem_limit_bytes=vmem_limit),
    )(logits_hw, MwT, Mh)

    # Free row-major reshape: (B, Dh*H, W) -> (B, Dh, H*W) for the D contraction.
    up2 = up_hw.reshape(B, Dh, H * W)

    # ---------------- kernel 3: streamed depth upsample + gating ----------------
    if d_tile is None:
        d_tile = 8 if D % 8 == 0 else D
    assert D % d_tile == 0 and (d_tile % 8 == 0 or d_tile == D)
    nd = D // d_tile

    x4 = x.reshape(B, C_in, D, H * W)                # free view of NCDHW

    y4 = pl.pallas_call(
        depth_upsample_gate_kernel,
        out_shape=jax.ShapeDtypeStruct((B, C_in, D, H * W), x.dtype),
        grid_spec=pltpu.PrefetchScalarGridSpec(
            num_scalar_prefetch=0,
            grid=(B, nd),
            in_specs=[
                pl.BlockSpec((1, Dh, H * W), lambda b, dt: (b, 0, 0)),
                pl.BlockSpec((d_tile, Dh), lambda b, dt: (dt, 0)),
                pl.BlockSpec((1, C_in, d_tile, H * W), lambda b, dt: (b, 0, dt, 0)),
            ],
            out_specs=pl.BlockSpec((1, C_in, d_tile, H * W),
                                   lambda b, dt: (b, 0, dt, 0)),
        ),
        compiler_params=pltpu.CompilerParams(
            dimension_semantics=("parallel", "parallel"),
            vmem_limit_bytes=vmem_limit),
    )(up2, Md, x4)

    # (B, C_in, D, H*W) -> NCDHW is a free reshape (no transpose needed).
    return y4.reshape(B, C_in, D, H, W)


# Pure-JAX reference of the same math (dense-kron interp; independently checks
# the separable kernel path).
def attention_gate_ref(x, g, params):
    B, C_in, D, H, W = x.shape
    Dh, Hh, Wh = D // 2, H // 2, W // 2
    xp = make_patches(x)
    gf = flatten_cl(g)
    xf = flatten_cl(x)
    interp = jnp.asarray(trilinear_matrix((Dh, Hh, Wh), (D, H, W)))
    theta = xp @ params["w_theta"]
    phi = gf @ params["w_phi"] + params["b_phi"]
    h = jnp.maximum(theta + phi, 0.0)
    logits = h @ params["w_psi"] + params["b_psi"]          # (B, Nh, 1)
    attn = jax.nn.softmax(logits, axis=1)
    attn_full = jnp.einsum("fn,bno->bfo", interp, attn)     # (B, Nf, 1)
    y_flat = attn_full * xf
    return y_flat.reshape(B, D, H, W, C_in).transpose(0, 4, 1, 2, 3)


if __name__ == "__main__":
    # Small shapes consistent with the module's forward contract:
    #   x: (B, in_channels, D, H, W),  g: (B, gating_channels, D/2, H/2, W/2)
    B, C_in, C_g, inter = 2, 4, 8, 8
    D = H = W = 8

    key = jax.random.PRNGKey(0)
    k_x, k_g, k_t, k_p, k_bp, k_s, k_bs = jax.random.split(key, 7)

    x = jax.random.normal(k_x, (B, C_in, D, H, W), dtype=jnp.float32)
    g = jax.random.normal(k_g, (B, C_g, D // 2, H // 2, W // 2), dtype=jnp.float32)

    # Deterministic synthetic parameters (Conv3d weight shapes flattened to
    # matmul form; (out,in,kd,kh,kw) -> (in*kd*kh*kw, out) with (c,kd,kh,kw)
    # flattening order matching make_patches).
    w_theta = 0.1 * jax.random.normal(k_t, (inter, C_in, 2, 2, 2), jnp.float32)
    w_theta = w_theta.reshape(inter, C_in * 8).T                       # (Cin*8, inter)
    w_phi = 0.1 * jax.random.normal(k_p, (inter, C_g), jnp.float32).T  # (Cg, inter)
    b_phi = 0.1 * jax.random.normal(k_bp, (1, inter), jnp.float32)
    w_psi = 0.1 * jax.random.normal(k_s, (1, inter), jnp.float32).T    # (inter, 1)
    b_psi = 0.1 * jax.random.normal(k_bs, (1, 1), jnp.float32)

    params = dict(w_theta=w_theta, w_phi=w_phi, b_phi=b_phi,
                  w_psi=w_psi, b_psi=b_psi)

    y = attention_gate_pallas(x, g, params)
    y = jax.block_until_ready(y)

    y_ref = jax.block_until_ready(attention_gate_ref(x, g, params))
    # Tolerance covers the EUP approximate-reciprocal softmax normalization.
    np.testing.assert_allclose(np.asarray(y), np.asarray(y_ref),
                               rtol=2e-2, atol=1e-6)

    print("KERNEL_OK")
</pallas_src>

<mosaic_0001>
module attributes {stable_mosaic.version = 11 : i64} {
  func.func @attn_logits_kernel(%arg0: i32, %arg1: memref<1x64x40xf32, #tpu.memory_space<vmem>>, %arg2: memref<40x8xf32, #tpu.memory_space<vmem>>, %arg3: memref<1x8xf32, #tpu.memory_space<vmem>>, %arg4: memref<1x8xf32, #tpu.memory_space<vmem>>, %arg5: memref<1xf32, #tpu.memory_space<smem>>, %arg6: memref<1x64x1xf32, #tpu.memory_space<vmem>>) attributes {dimension_semantics = [#tpu.dimension_semantics<parallel>], iteration_bounds = array<i64: 2>, scalar_prefetch = 0 : i64, scratch_operands = 0 : i64, tpu.core_type = #tpu.core_type<tc>, window_params = [{transform_indices = @transform_0, window_bounds = array<i64: 1, 64, 40>}, {pipeline_mode = #tpu.pipeline_mode<synchronous>, transform_indices = @transform_1, window_bounds = array<i64: 40, 8>}, {pipeline_mode = #tpu.pipeline_mode<synchronous>, transform_indices = @transform_2, window_bounds = array<i64: 1, 8>}, {pipeline_mode = #tpu.pipeline_mode<synchronous>, transform_indices = @transform_3, window_bounds = array<i64: 1, 8>}, {transform_indices = @transform_4, window_bounds = array<i64: 1>}, {transform_indices = @transform_5, window_bounds = array<i64: 1, 64, 1>}]} {
    %c0 = arith.constant 0 : index
    %c0_0 = arith.constant 0 : index
    %c0_1 = arith.constant 0 : index
    %0 = vector.load %arg1[%c0, %c0_0, %c0_1] : memref<1x64x40xf32, #tpu.memory_space<vmem>>, vector<1x64x40xf32>
    %1 = vector.shape_cast %0 : vector<1x64x40xf32> to vector<64x40xf32>
    %c0_2 = arith.constant 0 : index
    %c0_3 = arith.constant 0 : index
    %2 = vector.load %arg2[%c0_2, %c0_3] : memref<40x8xf32, #tpu.memory_space<vmem>>, vector<40x8xf32>
    %cst = arith.constant dense<0.000000e+00> : vector<64x8xf32>
    %3 = tpu.matmul %1, %2, %cst {dimension_numbers = #tpu.dot_dimension_numbers<[1], [0], [0], [1], [0, 0, 1, 1], [], []>} : vector<64x40xf32>, vector<40x8xf32>, vector<64x8xf32> -> vector<64x8xf32>
    %c0_4 = arith.constant 0 : index
    %c0_5 = arith.constant 0 : index
    %4 = vector.load %arg3[%c0_4, %c0_5] : memref<1x8xf32, #tpu.memory_space<vmem>>, vector<1x8xf32>
    %5 = vector.broadcast %4 : vector<1x8xf32> to vector<64x8xf32>
    %6 = arith.addf %3, %5 : vector<64x8xf32>
    %cst_6 = arith.constant 0.000000e+00 : f32
    %7 = vector.broadcast %cst_6 : f32 to vector<64x8xf32>
    %8 = arith.maximumf %6, %7 : vector<64x8xf32>
    %c0_7 = arith.constant 0 : index
    %c0_8 = arith.constant 0 : index
    %9 = vector.load %arg4[%c0_7, %c0_8] : memref<1x8xf32, #tpu.memory_space<vmem>>, vector<1x8xf32>
    %10 = vector.broadcast %9 : vector<1x8xf32> to vector<64x8xf32>
    %11 = arith.mulf %8, %10 : vector<64x8xf32>
    %cst_9 = arith.constant dense<0.000000e+00> : vector<64xf32>
    %12 = vector.multi_reduction <add>, %11, %cst_9 [1] : vector<64x8xf32> to vector<64xf32>
    %13 = vector.shape_cast %12 : vector<64xf32> to vector<64x1xf32>
    %c0_10 = arith.constant 0 : index
    %14 = memref.load %arg5[%c0_10] : memref<1xf32, #tpu.memory_space<smem>>
    %15 = vector.broadcast %14 : f32 to vector<64x1xf32>
    %16 = arith.addf %13, %15 : vector<64x1xf32>
    %c0_11 = arith.constant 0 : index
    %c0_12 = arith.constant 0 : index
    %c0_13 = arith.constant 0 : index
    %17 = vector.load %arg6[%c0_11, %c0_12, %c0_13] : memref<1x64x1xf32, #tpu.memory_space<vmem>>, vector<1x64x1xf32>
    %18 = vector.shape_cast %17 : vector<1x64x1xf32> to vector<64x1xf32>
    %19 = vector.shape_cast %16 : vector<64x1xf32> to vector<1x64x1xf32>
    tpu.vector_store %arg6[%c0_11, %c0_12, %c0_13], %19 {strides = array<i32>} : memref<1x64x1xf32, #tpu.memory_space<vmem>>, vector<1x64x1xf32>,
    return
  }
  func.func @transform_0(%arg0: i32) -> (i32, i32, i32) {
    %c0_i32 = arith.constant 0 : i32
    %c0_i32_0 = arith.constant 0 : i32
    %c0_i32_1 = arith.constant 0 : i32
    return %arg0, %c0_i32, %c0_i32_0 : i32, i32, i32
  }
  func.func @transform_1(%arg0: i32) -> (i32, i32) {
    %c0_i32 = arith.constant 0 : i32
    %c0_i32_0 = arith.constant 0 : i32
    %c0_i32_1 = arith.constant 0 : i32
    return %c0_i32, %c0_i32_0 : i32, i32
  }
  func.func @transform_2(%arg0: i32) -> (i32, i32) {
    %c0_i32 = arith.constant 0 : i32
    %c0_i32_0 = arith.constant 0 : i32
    %c0_i32_1 = arith.constant 0 : i32
    return %c0_i32, %c0_i32_0 : i32, i32
  }
  func.func @transform_3(%arg0: i32) -> (i32, i32) {
    %c0_i32 = arith.constant 0 : i32
    %c0_i32_0 = arith.constant 0 : i32
    %c0_i32_1 = arith.constant 0 : i32
    return %c0_i32, %c0_i32_0 : i32, i32
  }
  func.func @transform_4(%arg0: i32) -> i32 {
    %c0_i32 = arith.constant 0 : i32
    %c0_i32_0 = arith.constant 0 : i32
    return %c0_i32 : i32
  }
  func.func @transform_5(%arg0: i32) -> (i32, i32, i32) {
    %c0_i32 = arith.constant 0 : i32
    %c0_i32_0 = arith.constant 0 : i32
    %c0_i32_1 = arith.constant 0 : i32
    return %arg0, %c0_i32, %c0_i32_0 : i32, i32, i32
  }
}

</mosaic_0001>

<llo_original>
// kernel: tpu_custom_call.1
$region0: #{tpu_custom_call.1}
  #allocation0 [shape = 'u32[]', space=smem, size = 0x4, offset = 0x4, fixed_abs, tag = 'smem constant byte address 0x4 - core index']
  #allocation1 [shape = 'u32[144,128]{1,0:T(1,128)}', space=vmem, size = 0x12000, scoped, tag = 'internal scratch']
  #allocation2 [shape = 'f32[1]{0:T(128)S(6)}', space=smem, size = 0x200, scoped, tag = 'scoped memory for tpu_custom_call.1']
  %s0 = inlined_call_operand.vmem [shape: f32[2,64,40], index: 0, kind: input, shape index: {}]
  %s1 = inlined_call_operand.vmem [shape: f32[40,8], index: 1, kind: input, shape index: {}]
  %s2 = inlined_call_operand.vmem [shape: f32[1,8], index: 2, kind: input, shape index: {}]
  %s3 = inlined_call_operand.vmem [shape: f32[1,8], index: 3, kind: input, shape index: {}]
  %s4 = inlined_call_operand.<no memory space> [shape: f32[1], index: 4, kind: input, shape index: {}]
  %s5 = inlined_call_operand.vmem [shape: f32[2,64,1], index: 5, kind: output, shape index: {}]
  %s6 = sld [smem:[#allocation0]]
  $region53: #{tpu_custom_call.1} parent=0
    _
  %s8 = ssub.s32 1, %s6
  %s9 = scalar_select 0, %s8, %s6
  %10 = sst [smem:[#allocation2]] %s4
  loop: start=0, step=1, limit=4
  $region2: #{tpu_custom_call.1} parent=0 // loop_pre_header
    _
  $region3: #{tpu_custom_call.1} parent=0 // loop_header
    %s12 = sphi 0, %s16
    %p13 = scmp.ge.s32.totalorder %s12, 4
    %s22 = sphi 0, %s24
    %s25 = sphi 0, %s22
    %s26 = sphi 0, %s25
    %s42 = sphi 0, %s26
    %s46 = sphi 0, %s46
    %s48 = sphi 0, %s46
    %s49 = sphi 0, %s48
    %s63 = sphi 0, %s49
    %s67 = sphi 0, %s67
    %s69 = sphi 0, %s67
    %s70 = sphi 0, %s69
    %s84 = sphi 0, %s70
    %s88 = sphi 0, %s88
    %s90 = sphi 0, %s88
    %s91 = sphi 0, %s90
    %s105 = sphi 0, %s91
    %s109 = sphi 0, %s109
    %s111 = sphi 0, %s109
    %s112 = sphi 0, %s111
    %s126 = sphi 0, %s112
    %s132 = sphi 0, %s134
    %s135 = sphi 0, %s132
    %s136 = sphi 0, %s135
    %s152 = sphi 0, %s136
  $region4: #{tpu_custom_call.1} parent=0 // loop_header_branch
    %15 = sbr.rel (%p13) target = $region8
  $region5: #{tpu_custom_call.1} parent=0 // loop_body
    %s17 = ssub.s32 %s12, 1
    %s18 = ssub.s32 %s12, 2
    %s19 = sadd.s32 %s12, 1
    %s20 = ssub.s32 %s12, %s19
    %p21 = scmp.eq.s32.totalorder %s20, 0
    %s23 = sadd.s32 %s22, 1
    %s24 = scalar_select %p21, %s22, %s23
    %p27 = pneg %p21
    %p28 = scmp.eq.s32.totalorder %s12, 1
    %p29 = por %p27, %p28
    %p30 = scmp.ne.s32.totalorder %s22, %s25
    %p31 = scmp.eq.s32.totalorder %s12, 0
    %p32 = por %p30, %p31
    %p33 = scmp.ne.s32.totalorder %s22, %s25
    %p34 = scmp.eq.s32.totalorder %s17, 1
    %p35 = por %p33, %p34
    %p36 = scmp.ne.s32.totalorder %s25, %s26
    %p37 = scmp.eq.s32.totalorder %s17, 0
    %p38 = por %p36, %p37
    %p39 = scmp.ne.s32.totalorder %s25, %s26
    %p40 = scmp.eq.s32.totalorder %s18, 1
    %p41 = por %p39, %p40
    %p43 = scmp.ne.s32.totalorder %s26, %s42
    %p44 = scmp.eq.s32.totalorder %s18, 0
    %p45 = por %p43, %p44
    %s47 = sadd.s32 %s46, 1
    %p50 = scmp.eq.s32.totalorder %s12, 1
    %p51 = scmp.ne.s32.totalorder %s46, %s48
    %p52 = scmp.eq.s32.totalorder %s12, 0
    %p53 = por %p51, %p52
    %p54 = scmp.ne.s32.totalorder %s46, %s48
    %p55 = scmp.eq.s32.totalorder %s17, 1
    %p56 = por %p54, %p55
    %p57 = scmp.ne.s32.totalorder %s48, %s49
    %p58 = scmp.eq.s32.totalorder %s17, 0
    %p59 = por %p57, %p58
    %p60 = scmp.ne.s32.totalorder %s48, %s49
    %p61 = scmp.eq.s32.totalorder %s18, 1
    %p62 = por %p60, %p61
    %p64 = scmp.ne.s32.totalorder %s49, %s63
    %p65 = scmp.eq.s32.totalorder %s18, 0
    %p66 = por %p64, %p65
    %s68 = sadd.s32 %s67, 1
    %p71 = scmp.eq.s32.totalorder %s12, 1
    %p72 = scmp.ne.s32.totalorder %s67, %s69
    %p73 = scmp.eq.s32.totalorder %s12, 0
    %p74 = por %p72, %p73
    %p75 = scmp.ne.s32.totalorder %s67, %s69
    %p76 = scmp.eq.s32.totalorder %s17, 1
    %p77 = por %p75, %p76
    %p78 = scmp.ne.s32.totalorder %s69, %s70
    %p79 = scmp.eq.s32.totalorder %s17, 0
    %p80 = por %p78, %p79
    %p81 = scmp.ne.s32.totalorder %s69, %s70
    %p82 = scmp.eq.s32.totalorder %s18, 1
    %p83 = por %p81, %p82
    %p85 = scmp.ne.s32.totalorder %s70, %s84
    %p86 = scmp.eq.s32.totalorder %s18, 0
    %p87 = por %p85, %p86
    %s89 = sadd.s32 %s88, 1
    %p92 = scmp.eq.s32.totalorder %s12, 1
    %p93 = scmp.ne.s32.totalorder %s88, %s90
    %p94 = scmp.eq.s32.totalorder %s12, 0
    %p95 = por %p93, %p94
    %p96 = scmp.ne.s32.totalorder %s88, %s90
    %p97 = scmp.eq.s32.totalorder %s17, 1
    %p98 = por %p96, %p97
    %p99 = scmp.ne.s32.totalorder %s90, %s91
    %p100 = scmp.eq.s32.totalorder %s17, 0
    %p101 = por %p99, %p100
    %p102 = scmp.ne.s32.totalorder %s90, %s91
    %p103 = scmp.eq.s32.totalorder %s18, 1
    %p104 = por %p102, %p103
    %p106 = scmp.ne.s32.totalorder %s91, %s105
    %p107 = scmp.eq.s32.totalorder %s18, 0
    %p108 = por %p106, %p107
    %s110 = sadd.s32 %s109, 1
    %p113 = scmp.eq.s32.totalorder %s12, 1
    %p114 = scmp.ne.s32.totalorder %s109, %s111
    %p115 = scmp.eq.s32.totalorder %s12, 0
    %p116 = por %p114, %p115
    %p117 = scmp.ne.s32.totalorder %s109, %s111
    %p118 = scmp.eq.s32.totalorder %s17, 1
    %p119 = por %p117, %p118
    %p120 = scmp.ne.s32.totalorder %s111, %s112
    %p121 = scmp.eq.s32.totalorder %s17, 0
    %p122 = por %p120, %p121
    %p123 = scmp.ne.s32.totalorder %s111, %s112
    %p124 = scmp.eq.s32.totalorder %s18, 1
    %p125 = por %p123, %p124
    %p127 = scmp.ne.s32.totalorder %s112, %s126
    %p128 = scmp.eq.s32.totalorder %s18, 0
    %p129 = por %p127, %p128
    %s130 = ssub.s32 %s12, %s19
    %p131 = scmp.eq.s32.totalorder %s130, 0
    %s133 = sadd.s32 %s132, 1
    %s134 = scalar_select %p131, %s132, %s133
    %p137 = pneg %p131
    %p138 = scmp.eq.s32.totalorder %s12, 1
    %p139 = por %p137, %p138
    %p140 = scmp.ne.s32.totalorder %s132, %s135
    %p141 = scmp.eq.s32.totalorder %s12, 0
    %p142 = por %p140, %p141
    %p143 = scmp.ne.s32.totalorder %s132, %s135
    %p144 = scmp.eq.s32.totalorder %s17, 1
    %p145 = por %p143, %p144
    %p146 = scmp.ne.s32.totalorder %s135, %s136
    %p147 = scmp.eq.s32.totalorder %s17, 0
    %p148 = por %p146, %p147
    %p149 = scmp.ne.s32.totalorder %s135, %s136
    %p150 = scmp.eq.s32.totalorder %s18, 1
    %p151 = por %p149, %p150
    %p153 = scmp.ne.s32.totalorder %s136, %s152
    %p154 = scmp.eq.s32.totalorder %s18, 0
    %p155 = por %p153, %p154
    %p156 = scmp.le.s32.totalorder 1, %s12
    %p157 = scmp.lt.s32.totalorder %s12, 3
    %p158 = pnand %p156, %p157
    %p159 = pneg %p158
    // Predicated region
    $region9: #{tpu_custom_call.1} parent=5 // pred_check
      _
    $region10: #{tpu_custom_call.1} parent=5 // pred_check_branch
      %161 = sbr.rel (%p158) target = $region12
    $region11: #{tpu_custom_call.1} parent=5 // pred_region
      %s162 = ssub.s32 %s12, 1
      // Predicated region
      $region13: #{tpu_custom_call.1} parent=11 // pred_check
        %p163 = pneg %p59
      $region14: #{tpu_custom_call.1} parent=11 // pred_check_branch
        %165 = sbr.rel (%p163) target = $region16
      $region15: #{tpu_custom_call.1} parent=11 // pred_region
        _
      $region16: #{tpu_custom_call.1} parent=11 // pred_fallthru
        _
      // Predicated region
      $region17: #{tpu_custom_call.1} parent=11 // pred_check
        %p166 = pneg %p80
      $region18: #{tpu_custom_call.1} parent=11 // pred_check_branch
        %168 = sbr.rel (%p166) target = $region20
      $region19: #{tpu_custom_call.1} parent=11 // pred_region
        _
      $region20: #{tpu_custom_call.1} parent=11 // pred_fallthru
        _
      // Predicated region
      $region21: #{tpu_custom_call.1} parent=11 // pred_check
        %p169 = pneg %p101
      $region22: #{tpu_custom_call.1} parent=11 // pred_check_branch
        %171 = sbr.rel (%p169) target = $region24
      $region23: #{tpu_custom_call.1} parent=11 // pred_region
        _
      $region24: #{tpu_custom_call.1} parent=11 // pred_fallthru
        _
      // Predicated region
      $region25: #{tpu_custom_call.1} parent=11 // pred_check
        %p172 = pneg %p122
      $region26: #{tpu_custom_call.1} parent=11 // pred_check_branch
        %174 = sbr.rel (%p172) target = $region28
      $region27: #{tpu_custom_call.1} parent=11 // pred_region
        _
      $region28: #{tpu_custom_call.1} parent=11 // pred_fallthru
        _
    $region12: #{tpu_custom_call.1} parent=5 // pred_fallthru
      _
    %p175 = scmp.lt.s32.totalorder %s12, 2
    // Predicated region
    $region29: #{tpu_custom_call.1} parent=5 // pred_check
      %p176 = pneg %p175
    $region30: #{tpu_custom_call.1} parent=5 // pred_check_branch
      %178 = sbr.rel (%p176) target = $region32
    $region31: #{tpu_custom_call.1} parent=5 // pred_region
      // Predicated region
      $region33: #{tpu_custom_call.1} parent=31 // pred_check
        %p179 = pneg %p32
      $region34: #{tpu_custom_call.1} parent=31 // pred_check_branch
        %181 = sbr.rel (%p179) target = $region36
      $region35: #{tpu_custom_call.1} parent=31 // pred_region
        %p182 = scmp.lt.s32.totalorder %s12, 1
        %s183 = scalar_select %p182, %s12, 1
        %s184 = smul.addr %s183, 8
        %s185 = smul.addr %s184, 8
        %s186 = scalar_lea.vmem %s0, %s185
      $region36: #{tpu_custom_call.1} parent=31 // pred_fallthru
        _
    $region32: #{tpu_custom_call.1} parent=5 // pred_fallthru
      _
    %p187 = scmp.le.s32.totalorder 1, %s12
    %p188 = scmp.lt.s32.totalorder %s12, 3
    %p189 = pnand %p187, %p188
    %p190 = pneg %p189
    // Predicated region
    $region37: #{tpu_custom_call.1} parent=5 // pred_check
      _
    $region38: #{tpu_custom_call.1} parent=5 // pred_check_branch
      %192 = sbr.rel (%p189) target = $region40
    $region39: #{tpu_custom_call.1} parent=5 // pred_region
      %s193 = ssub.s32 %s12, 1
      %p194 = scmp.lt.s32.totalorder %s17, 1
      %s195 = scalar_select %p194, %s17, 1
      %s196 = smul.addr %s195, 8
      %s197 = smul.addr %s196, 8
      %s198 = scalar_lea.vmem %s0, %s197
      %p199 = pneg %p38
      %p200 = pneg %p35
      %p201 = pneg %p59
      %p202 = pneg %p56
      %p203 = pneg %p80
      %p204 = pneg %p77
      %p205 = pneg %p101
      %p206 = pneg %p98
      %p207 = pneg %p122
      %p208 = pneg %p119
      %p209 = pneg %p148
      %p210 = pneg %p145
      %p211 = scmp.lt.s32.totalorder %s17, 1
      %s212 = scalar_select %p211, %s17, 1
      %s213 = smul.addr %s212, 8
      %s214 = smul.addr %s213, 8
      %s215 = scalar_lea.vmem %s5, %s214
      %p216 = scmp.lt.s32.totalorder %s17, 1
      %s217 = scalar_select %p216, %s17, 1
      %s218 = smul.addr %s217, 8
      %s219 = smul.addr %s218, 8
      %s220 = scalar_lea.vmem %s0, %s219
      %p221 = scmp.lt.s32.totalorder %s17, 1
      %s222 = scalar_select %p221, %s17, 1
      %s223 = smul.addr %s222, 8
      %s224 = smul.addr %s223, 8
      %s225 = scalar_lea.vmem %s5, %s224
      %v226 = vld [vmem:[%s220] sm:$0xff]
      %v227 = vld [vmem:[%s220 + $0x8] sm:$0xff]
      %v228 = vld [vmem:[%s220 + $0x10] sm:$0xff]
      %v229 = vld [vmem:[%s220 + $0x18] sm:$0xff]
      %v230 = vld [vmem:[%s220 + $0x20] sm:$0xff]
      %v231 = vld [vmem:[%s220 + $0x28] sm:$0xff]
      %v232 = vld [vmem:[%s220 + $0x30] sm:$0xff]
      %v233 = vld [vmem:[%s220 + $0x38] sm:$0xff]
      %v234 = vld [vmem:[%s1] sm:$0xff]
      %v235 = vld [vmem:[%s1 + $0x8] sm:$0xff]
      %v236 = vld [vmem:[%s1 + $0x10] sm:$0xff]
      %v237 = vld [vmem:[%s1 + $0x18] sm:$0xff]
      %v238 = vld [vmem:[%s1 + $0x20] sm:$0xff]
      %v239 = vld [vmem:[%s2] sm:$0x1]
      %v241 = vlaneseq
      %v242 = vshrl.u32 %v241, 7
      %v243 = vsub.s32 0, %v242
      %v244 = vrot.slane %v239, %v243
      %vm246 = vcmask 326656
      %v248 = vsel %vm246, %v226, 0
      %v251 = vsel %vm246, %v227, 0
      %v254 = vsel %vm246, %v228, 0
      %v257 = vsel %vm246, %v229, 0
      %v260 = vsel %vm246, %v230, 0
      %v263 = vsel %vm246, %v231, 0
      %v266 = vsel %vm246, %v232, 0
      %v269 = vsel %vm246, %v233, 0
      %271 = vmatprep.subr.mxu0 0.0
      %272 = vmatpush1.msra.mxu0 %v234
      %273 = vmatprep.subr.mxu0 0.0
      %274 = vmatpush1.msra.mxu0 %v235
      %275 = vmatprep.subr.mxu0 0.0
      %276 = vmatpush1.msra.mxu0 %v236
      %277 = vmatprep.subr.mxu0 0.0
      %278 = vmatpush1.msra.mxu0 %v237
      %279 = vmatprep.subr.mxu0 0.0
      %280 = vmatpush1.msra.mxu0 %v238
      %281 = vmatprep.subr.mxu0 0.0
      %282 = vmatpush1.msra.mxu0 0.0
      %283 = vmatprep.subr.mxu0 0.0
      %284 = vmatpush1.msra.mxu0 0.0
      %285 = vmatprep.subr.mxu0 0.0
      %286 = vmatpush1.msra.mxu0 0.0
      %287 = vmatprep.subr.mxu0 0.0
      %288 = vmatpush1.msra.mxu0 0.0
      %289 = vmatprep.subr.mxu0 0.0
      %290 = vmatpush1.msra.mxu0 0.0
      %291 = vmatprep.subr.mxu0 0.0
      %292 = vmatpush1.msra.mxu0 0.0
      %293 = vmatprep.subr.mxu0 0.0
      %294 = vmatpush1.msra.mxu0 0.0
      %295 = vmatprep.subr.mxu0 0.0
      %296 = vmatpush1.msra.mxu0 0.0
      %297 = vmatprep.subr.mxu0 0.0
      %298 = vmatpush1.msra.mxu0 0.0
      %299 = vmatprep.subr.mxu0 0.0
      %300 = vmatpush1.msra.mxu0 0.0
      %301 = vmatprep.subr.mxu0 0.0
      %302 = vmatpush1.msra.mxu0 0.0
      %303 = vmatprep.subr.mxu0 0.0
      %304 = vmatpush1.msra.mxu0 0.0
      %305 = vmatprep.subr.mxu0 0.0
      %306 = vmatpush1.msra.mxu0 0.0
      %307 = vmatprep.subr.mxu0 0.0
      %308 = vmatpush1.msra.mxu0 0.0
      %309 = vmatprep.subr.mxu0 0.0
      %310 = vmatpush1.msra.mxu0 0.0
      %311 = vmatprep.subr.mxu0 0.0
      %312 = vmatpush1.msra.mxu0 0.0
      %313 = vmatprep.subr.mxu0 0.0
      %314 = vmatpush1.msra.mxu0 0.0
      %315 = vmatprep.subr.mxu0 0.0
      %316 = vmatpush1.msra.mxu0 0.0
      %317 = vmatprep.subr.mxu0 0.0
      %318 = vmatpush1.msra.mxu0 0.0
      %319 = vmatprep.subr.mxu0 0.0
      %320 = vmatpush1.msra.mxu0 0.0
      %321 = vmatprep.subr.mxu0 0.0
      %322 = vmatpush1.msra.mxu0 0.0
      %323 = vmatprep.subr.mxu0 0.0
      %324 = vmatpush1.msra.mxu0 0.0
      %325 = vmatprep.subr.mxu0 0.0
      %326 = vmatpush1.msra.mxu0 0.0
      %327 = vmatprep.subr.mxu0 0.0
      %328 = vmatpush1.msra.mxu0 0.0
      %329 = vmatprep.subr.mxu0 0.0
      %330 = vmatpush1.msra.mxu0 0.0
      %331 = vmatprep.subr.mxu0 0.0
      %332 = vmatpush1.msra.mxu0 0.0
      %333 = vmatprep.subr.mxu0 0.0
      %334 = vmatpush1.msra.mxu0 0.0
      %335 = vmatprep.mubr.f32.mxu0 0.0
      %336 = vmatmul.mubr.f32.gmra.mrb[0].mxu0 %v248
      %v337 = vpop.f32.mrb[0].mxu0
      %v338 = vadd.f32 %v244, %v337
      %v339 = vpop.f32.mrb[0].mxu0
      %340 = vmatprep.mubr.f32.mxu0 0.0
      %341 = vmatmul.mubr.f32.gmra.mrb[0].mxu0 %v251
      %v342 = vpop.f32.mrb[0].mxu0
      %v343 = vadd.f32 %v244, %v342
      %v344 = vpop.f32.mrb[0].mxu0
      %345 = vmatprep.mubr.f32.mxu0 0.0
      %346 = vmatmul.mubr.f32.gmra.mrb[0].mxu0 %v254
      %v347 = vpop.f32.mrb[0].mxu0
      %v348 = vadd.f32 %v244, %v347
      %v349 = vpop.f32.mrb[0].mxu0
      %350 = vmatprep.mubr.f32.mxu0 0.0
      %351 = vmatmul.mubr.f32.gmra.mrb[0].mxu0 %v257
      %v352 = vpop.f32.mrb[0].mxu0
      %v353 = vadd.f32 %v244, %v352
      %v354 = vpop.f32.mrb[0].mxu0
      %355 = vmatprep.mubr.f32.mxu0 0.0
      %356 = vmatmul.mubr.f32.gmra.mrb[0].mxu0 %v260
      %v357 = vpop.f32.mrb[0].mxu0
      %v358 = vadd.f32 %v244, %v357
      %v359 = vpop.f32.mrb[0].mxu0
      %360 = vmatprep.mubr.f32.mxu0 0.0
      %361 = vmatmul.mubr.f32.gmra.mrb[0].mxu0 %v263
      %v362 = vpop.f32.mrb[0].mxu0
      %v363 = vadd.f32 %v244, %v362
      %v364 = vpop.f32.mrb[0].mxu0
      %365 = vmatprep.mubr.f32.mxu0 0.0
      %366 = vmatmul.mubr.f32.gmra.mrb[0].mxu0 %v266
      %v367 = vpop.f32.mrb[0].mxu0
      %v368 = vadd.f32 %v244, %v367
      %v369 = vpop.f32.mrb[0].mxu0
      %370 = vmatprep.mubr.f32.mxu0 0.0
      %371 = vmatmul.mubr.f32.gmra.mrb[0].mxu0 %v269
      %v372 = vpop.f32.mrb[0].mxu0
      %v373 = vadd.f32 %v244, %v372
      %v374 = vpop.f32.mrb[0].mxu0
      %375 = vdwg.mxu0
      %v376 = vmax.f32 %v338, 0.0
      %v377 = vmax.f32 %v343, 0.0
      %v378 = vmax.f32 %v348, 0.0
      %v379 = vmax.f32 %v353, 0.0
      %v380 = vmax.f32 %v358, 0.0
      %v381 = vmax.f32 %v363, 0.0
      %v382 = vmax.f32 %v368, 0.0
      %v383 = vmax.f32 %v373, 0.0
      %v384 = vld [vmem:[%s3] sm:$0x1]
      %v386 = vlaneseq
      %v387 = vshrl.u32 %v386, 7
      %v388 = vsub.s32 0, %v387
      %v389 = vrot.slane %v384, %v388
      %v391 = vmul.f32 %v376, %v389
      %v392 = vmul.f32 %v377, %v389
      %v393 = vmul.f32 %v378, %v389
      %v394 = vmul.f32 %v379, %v389
      %v395 = vmul.f32 %v380, %v389
      %v396 = vmul.f32 %v381, %v389
      %v397 = vmul.f32 %v382, %v389
      %v398 = vmul.f32 %v383, %v389
      %vm399 = vcmask 64512
      %v400 = vsel %vm399, %v391, 0.0
      %401 = vadd.xlane.f32.xlu0 %v400
      %v402 = vpop.xlane.xlu0 %401
      %v403 = vsel %vm399, %v392, 0.0
      %404 = vadd.xlane.f32.xlu0 %v403
      %v405 = vpop.xlane.xlu0 %404
      %v406 = vsel %vm399, %v393, 0.0
      %407 = vadd.xlane.f32.xlu0 %v406
      %v408 = vpop.xlane.xlu0 %407
      %v409 = vsel %vm399, %v394, 0.0
      %410 = vadd.xlane.f32.xlu0 %v409
      %v411 = vpop.xlane.xlu0 %410
      %v412 = vsel %vm399, %v395, 0.0
      %413 = vadd.xlane.f32.xlu0 %v412
      %v414 = vpop.xlane.xlu0 %413
      %v415 = vsel %vm399, %v396, 0.0
      %416 = vadd.xlane.f32.xlu0 %v415
      %v417 = vpop.xlane.xlu0 %416
      %v418 = vsel %vm399, %v397, 0.0
      %419 = vadd.xlane.f32.xlu0 %v418
      %v420 = vpop.xlane.xlu0 %419
      %v421 = vsel %vm399, %v398, 0.0
      %422 = vadd.xlane.f32.xlu0 %v421
      %v423 = vpop.xlane.xlu0 %422
      %s424 = sld [smem:[#allocation2]]
      %v425 = vstv %s424
      %v426 = vadd.f32 %v402, %v425
      %v427 = vadd.f32 %v405, %v425
      %v428 = vadd.f32 %v408, %v425
      %v429 = vadd.f32 %v411, %v425
      %v430 = vadd.f32 %v414, %v425
      %v431 = vadd.f32 %v417, %v425
      %v432 = vadd.f32 %v420, %v425
      %v433 = vadd.f32 %v423, %v425
      %vm434 = vcmask 7168
      %435 = vst.msk [vmem:[%s225] sm:$0xff] %vm434, %v426
      %436 = vst.msk [vmem:[%s225 + $0x8] sm:$0xff] %vm434, %v427
      %437 = vst.msk [vmem:[%s225 + $0x10] sm:$0xff] %vm434, %v428
      %438 = vst.msk [vmem:[%s225 + $0x18] sm:$0xff] %vm434, %v429
      %439 = vst.msk [vmem:[%s225 + $0x20] sm:$0xff] %vm434, %v430
      %440 = vst.msk [vmem:[%s225 + $0x28] sm:$0xff] %vm434, %v431
      %441 = vst.msk [vmem:[%s225 + $0x30] sm:$0xff] %vm434, %v432
      %442 = vst.msk [vmem:[%s225 + $0x38] sm:$0xff] %vm434, %v433
      %p443 = scmp.lt.s32.totalorder %s17, 1
      %s444 = scalar_select %p443, %s17, 1
      %s445 = smul.addr %s444, 8
      %s446 = smul.addr %s445, 8
      %s447 = scalar_lea.vmem %s5, %s446
      // Predicated region
      $region41: #{tpu_custom_call.1} parent=39 // pred_check
        %p448 = pneg %p145
      $region42: #{tpu_custom_call.1} parent=39 // pred_check_branch
        %450 = sbr.rel (%p448) target = $region44
      $region43: #{tpu_custom_call.1} parent=39 // pred_region
        _
      $region44: #{tpu_custom_call.1} parent=39 // pred_fallthru
        _
    $region40: #{tpu_custom_call.1} parent=5 // pred_fallthru
      _
    %p451 = scmp.le.s32.totalorder 2, %s12
    // Predicated region
    $region45: #{tpu_custom_call.1} parent=5 // pred_check
      %p452 = pneg %p451
    $region46: #{tpu_custom_call.1} parent=5 // pred_check_branch
      %454 = sbr.rel (%p452) target = $region48
    $region47: #{tpu_custom_call.1} parent=5 // pred_region
      %s455 = ssub.s32 %s12, 2
      // Predicated region
      $region49: #{tpu_custom_call.1} parent=47 // pred_check
        %p456 = pneg %p151
      $region50: #{tpu_custom_call.1} parent=47 // pred_check_branch
        %458 = sbr.rel (%p456) target = $region52
      $region51: #{tpu_custom_call.1} parent=47 // pred_region
        %p459 = scmp.lt.s32.totalorder %s18, 1
        %s460 = scalar_select %p459, %s18, 1
        %s461 = smul.addr %s460, 8
        %s462 = smul.addr %s461, 8
        %s463 = scalar_lea.vmem %s5, %s462
      $region52: #{tpu_custom_call.1} parent=47 // pred_fallthru
        _
    $region48: #{tpu_custom_call.1} parent=5 // pred_fallthru
      _
  $region6: #{tpu_custom_call.1} parent=0 // loop_footer
    %s16 = sadd.s32 1, %s12
  $region7: #{tpu_custom_call.1} parent=0 // loop_footer_branch
    %11 = sbr.rel target = $region3
  $region8: #{tpu_custom_call.1} parent=0 // loop_exit
    _

</llo_original>
